<compile_context>
chip_gen: v6e
topology: v6e:2x2x1
jax: 0.10.0
libtpu: 0.0.40
codegen_flags: <defaults>
</compile_context>

<pallas_src>
import functools

import jax
import jax.numpy as jnp
import numpy as np
from jax.experimental import pallas as pl
from jax.experimental.pallas import tpu as pltpu

_LANES = 128  # lane tile for the batch axis (lane-dense stores)


def dtlz2_kernel(xt_ref, f_ref, *, n_obj, n_var):
    """DTLZ2 objectives for one (n_var, TB) tile of decision vectors.

    xt_ref: (n_var, TB) f32 in VMEM  (variable index on sublanes, batch on lanes)
    f_ref : (n_obj, TB) f32 in VMEM  (objective index on sublanes, batch on lanes)
    """
    xt = xt_ref[...]
    m = n_obj - 1                                # len(X_); X_M = x[m:]

    # g2(X_M) = sum_{j>=m} (x_j - 0.5)^2  -- unrolled row adds (VPU only, no XLU).
    # TODO(synk): for very large n_var switch this unroll to a masked axis-0
    # reduction to bound trace size.
    d = xt - 0.5
    sq = d * d
    g = jnp.zeros((1, xt.shape[1]), jnp.float32)
    for j in range(m, n_var):
        g = g + sq[j:j + 1, :]

    # alpha == 1, so pow(X_, alpha) == X_.  Constant 3.14 matches the reference
    # (intentionally NOT jnp.pi).
    theta = xt * jnp.float32(3.14 / 2.0)
    c = jnp.cos(theta)
    s = jnp.sin(theta)

    # Carry base * prefix-product of cos across objectives: O(n_obj) multiplies
    # instead of the previous O(n_obj^2) masked-sum extracts.
    #   f_0 = (1+g) * prod_{j<m} cos(theta_j)
    #   f_i = (1+g) * prod_{j<m-i} cos(theta_j) * sin(theta_{m-i}),  i >= 1
    rows = [None] * n_obj
    prod = 1.0 + g                               # base * P_0
    for i in range(m, 0, -1):
        j = m - i
        rows[i] = prod * s[j:j + 1, :]           # base * P_{m-i} * sin_{m-i}
        prod = prod * c[j:j + 1, :]              # -> base * P_{m-i+1}
    rows[0] = prod                               # base * P_m

    f_ref[...] = jnp.concatenate(rows, axis=0)   # single (n_obj, TB) store


def _dtlz2_pallas(xt, n_obj):
    """xt: (n_var, Bp) f32 with Bp a multiple of _LANES -> (n_obj, Bp) f32."""
    n_var, bp = xt.shape
    return pl.pallas_call(
        functools.partial(dtlz2_kernel, n_obj=n_obj, n_var=n_var),
        out_shape=jax.ShapeDtypeStruct((n_obj, bp), jnp.float32),
        grid=(bp // _LANES,),
        in_specs=[pl.BlockSpec((n_var, _LANES), lambda b: (0, b))],
        out_specs=pl.BlockSpec((n_obj, _LANES), lambda b: (0, b)),
        compiler_params=pltpu.CompilerParams(
            dimension_semantics=("parallel",)),   # v7x: both TCs share the batch
        cost_estimate=pl.CostEstimate(
            flops=bp * (2 * n_var + 4 * n_obj),
            transcendentals=2 * n_var * bp,
            bytes_accessed=4 * bp * (n_var + n_obj)),
    )(xt)


class DTLZ2Loss:
    """JAX/Pallas port of problems/DTLZ/losses.py::Loss (DTLZ2). No learnable params."""

    def __init__(self, loss_name_list, n_var=2, **kwargs):
        self.n_obj = len(loss_name_list)
        self.k = n_var - self.n_obj + 1
        self.n_var = n_var
        assert n_var >= self.n_obj - 1, "DTLZ2 requires n_var >= n_obj - 1"

        n_obj = self.n_obj

        @jax.jit
        def _forward_single(x):
            # x: (n_var,) -> list of n_obj arrays of shape (1,)
            nv = x.shape[0]
            xt = x.astype(jnp.float32).reshape(nv, 1)
            xt = jnp.pad(xt, ((0, 0), (0, _LANES - 1)))   # one lane-dense tile
            f = _dtlz2_pallas(xt, n_obj)                  # (n_obj, _LANES)
            return [f[i, 0:1] for i in range(n_obj)]

        @jax.jit
        def _forward_batch(xb):
            # xb: (B, n_var) -> (B, n_obj); amortizes launch/DMA overhead
            b = xb.shape[0]
            bp = ((b + _LANES - 1) // _LANES) * _LANES
            xt = xb.astype(jnp.float32).T                 # (n_var, B)
            xt = jnp.pad(xt, ((0, 0), (0, bp - b)))
            f = _dtlz2_pallas(xt, n_obj)                  # (n_obj, bp)
            return f[:, :b].T                             # (B, n_obj)

        self._forward_single = _forward_single
        self.evaluate_batch = _forward_batch

    def __call__(self, x, y=None):
        # matches the PyTorch module: list of n_obj tensors, each shape (1,)
        return self._forward_single(jnp.asarray(x))


def ref_forward(x, n_obj):
    """Pure-JAX reference mirroring the PyTorch forward exactly."""
    X_, X_M = x[:n_obj - 1], x[n_obj - 1:]
    g = jnp.sum((X_M - 0.5) ** 2)
    f = []
    for i in range(n_obj):
        _f = 1.0 + g
        _f = _f * jnp.prod(jnp.cos(X_[:len(X_) - i] * 3.14 / 2.0))
        if i > 0:
            _f = _f * jnp.sin(X_[len(X_) - i] * 3.14 / 2.0)
        f.append(_f.reshape(-1))
    return f


if __name__ == "__main__":
    key = jax.random.PRNGKey(0)
    kx, ky, kb = jax.random.split(key, 3)

    # small, shape-consistent example: 3 objectives, 7 decision variables
    loss_name_list = ["loss_a", "loss_b", "loss_c"]
    n_obj = len(loss_name_list)
    n_var = 7

    x = jax.random.uniform(kx, (n_var,), dtype=jnp.float32)
    y = jax.random.uniform(ky, (n_var,), dtype=jnp.float32)  # unused, like PyTorch

    loss = DTLZ2Loss(loss_name_list, n_var=n_var)

    # single-vector forward (PyTorch module semantics)
    f = jax.block_until_ready(loss(x, y))
    ref = ref_forward(x, n_obj)
    for a, b in zip(f, ref):
        np.testing.assert_allclose(np.asarray(a), np.asarray(b), rtol=1e-5, atol=1e-6)

    # batched forward: many decision vectors per pallas_call (main perf lever)
    B = 256
    xb = jax.random.uniform(kb, (B, n_var), dtype=jnp.float32)
    fb = jax.block_until_ready(loss.evaluate_batch(xb))
    ref_b = jax.vmap(lambda xv: jnp.concatenate(ref_forward(xv, n_obj)))(xb)
    np.testing.assert_allclose(np.asarray(fb), np.asarray(ref_b), rtol=1e-5, atol=1e-5)

    print("KERNEL_OK")
</pallas_src>

<mosaic_0001>
module attributes {stable_mosaic.version = 11 : i64} {
  func.func @dtlz2_kernel(%arg0: i32, %arg1: memref<7x128xf32, #tpu.memory_space<vmem>>, %arg2: memref<3x128xf32, #tpu.memory_space<vmem>>) attributes {dimension_semantics = [#tpu.dimension_semantics<parallel>], iteration_bounds = array<i64: 1>, scalar_prefetch = 0 : i64, scratch_operands = 0 : i64, tpu.core_type = #tpu.core_type<tc>, window_params = [{transform_indices = @transform_0, window_bounds = array<i64: 7, 128>}, {transform_indices = @transform_1, window_bounds = array<i64: 3, 128>}]} {
    %c0 = arith.constant 0 : index
    %c0_0 = arith.constant 0 : index
    %0 = vector.load %arg1[%c0, %c0_0] : memref<7x128xf32, #tpu.memory_space<vmem>>, vector<7x128xf32>
    %cst = arith.constant 5.000000e-01 : f32
    %1 = vector.broadcast %cst : f32 to vector<7x128xf32>
    %2 = arith.subf %0, %1 : vector<7x128xf32>
    %3 = arith.mulf %2, %2 : vector<7x128xf32>
    %cst_1 = arith.constant 0.000000e+00 : f32
    %4 = vector.broadcast %cst_1 : f32 to vector<1x128xf32>
    %5 = vector.extract_strided_slice %3 {offsets = [2, 0], sizes = [1, 128], strides = [1, 1]} : vector<7x128xf32> to vector<1x128xf32>
    %6 = arith.addf %4, %5 : vector<1x128xf32>
    %7 = vector.extract_strided_slice %3 {offsets = [3, 0], sizes = [1, 128], strides = [1, 1]} : vector<7x128xf32> to vector<1x128xf32>
    %8 = arith.addf %6, %7 : vector<1x128xf32>
    %9 = vector.extract_strided_slice %3 {offsets = [4, 0], sizes = [1, 128], strides = [1, 1]} : vector<7x128xf32> to vector<1x128xf32>
    %10 = arith.addf %8, %9 : vector<1x128xf32>
    %11 = vector.extract_strided_slice %3 {offsets = [5, 0], sizes = [1, 128], strides = [1, 1]} : vector<7x128xf32> to vector<1x128xf32>
    %12 = arith.addf %10, %11 : vector<1x128xf32>
    %13 = vector.extract_strided_slice %3 {offsets = [6, 0], sizes = [1, 128], strides = [1, 1]} : vector<7x128xf32> to vector<1x128xf32>
    %14 = arith.addf %12, %13 : vector<1x128xf32>
    %cst_2 = arith.constant 1.570000e+00 : f32
    %15 = vector.broadcast %cst_2 : f32 to vector<7x128xf32>
    %16 = arith.mulf %0, %15 : vector<7x128xf32>
    %17 = math.cos %16 : vector<7x128xf32>
    %18 = math.sin %16 : vector<7x128xf32>
    %cst_3 = arith.constant 1.000000e+00 : f32
    %19 = vector.broadcast %cst_3 : f32 to vector<1x128xf32>
    %20 = arith.addf %19, %14 : vector<1x128xf32>
    %21 = vector.extract_strided_slice %18 {offsets = [0, 0], sizes = [1, 128], strides = [1, 1]} : vector<7x128xf32> to vector<1x128xf32>
    %22 = arith.mulf %20, %21 : vector<1x128xf32>
    %23 = vector.extract_strided_slice %17 {offsets = [0, 0], sizes = [1, 128], strides = [1, 1]} : vector<7x128xf32> to vector<1x128xf32>
    %24 = arith.mulf %20, %23 : vector<1x128xf32>
    %25 = vector.extract_strided_slice %18 {offsets = [1, 0], sizes = [1, 128], strides = [1, 1]} : vector<7x128xf32> to vector<1x128xf32>
    %26 = arith.mulf %24, %25 : vector<1x128xf32>
    %27 = vector.extract_strided_slice %17 {offsets = [1, 0], sizes = [1, 128], strides = [1, 1]} : vector<7x128xf32> to vector<1x128xf32>
    %28 = arith.mulf %24, %27 : vector<1x128xf32>
    %29 = tpu.concatenate %28, %26, %22 in 0 : vector<1x128xf32>, vector<1x128xf32>, vector<1x128xf32> -> vector<3x128xf32>
    %c0_4 = arith.constant 0 : index
    %c0_5 = arith.constant 0 : index
    %30 = vector.load %arg2[%c0_4, %c0_5] : memref<3x128xf32, #tpu.memory_space<vmem>>, vector<3x128xf32>
    tpu.vector_store %arg2[%c0_4, %c0_5], %29 {strides = array<i32>} : memref<3x128xf32, #tpu.memory_space<vmem>>, vector<3x128xf32>,
    return
  }
  func.func @transform_0(%arg0: i32) -> (i32, i32) {
    %c0_i32 = arith.constant 0 : i32
    %c0_i32_0 = arith.constant 0 : i32
    return %c0_i32, %arg0 : i32, i32
  }
  func.func @transform_1(%arg0: i32) -> (i32, i32) {
    %c0_i32 = arith.constant 0 : i32
    %c0_i32_0 = arith.constant 0 : i32
    return %c0_i32, %arg0 : i32, i32
  }
}

</mosaic_0001>

<llo_original>
// kernel: _forward_single.1
$region0: #{_forward_single.1}
  #allocation0 [shape = 'u32[]', space=smem, size = 0x4, offset = 0x4, fixed_abs, tag = 'smem constant byte address 0x4 - core index']
  #allocation1 [shape = 'u32[144,128]{1,0:T(1,128)}', space=vmem, size = 0x12000, scoped, tag = 'internal scratch']
  %s0 = inlined_call_operand.vmem [shape: f32[7,128], index: 0, kind: input, shape index: {}]
  %s1 = inlined_call_operand.vmem [shape: f32[3,128], index: 1, kind: output, shape index: {}]
  %s2 = sld [smem:[#allocation0]]
  $region14: #{_forward_single.1} parent=0
    _
  %s4 = ssub.s32 1, %s2
  %s5 = scalar_select 0, %s4, %s2
  // Predicated region
  $region2: #{_forward_single.1} parent=0 // pred_check
    _
  $region3: #{_forward_single.1} parent=0 // pred_check_branch
    %7 = sbr.rel (0) target = $region5
  $region4: #{_forward_single.1} parent=0 // pred_region
    _
  $region5: #{_forward_single.1} parent=0 // pred_fallthru
    _
  %v8 = vld [vmem:[%s0] sm:$0x7f]
  %v9 = vsub.f32 %v8, 0.5
  %v10 = vmul.f32 %v9, %v9
  %v11 = vadd.f32 %v10, 0.0
  %v13 = vrot.slane %v10, 1
  %v15 = vadd.f32 %v11, %v13
  %v16 = vrot.slane %v10, 2
  %v18 = vadd.f32 %v15, %v16
  %v19 = vrot.slane %v10, 3
  %v21 = vadd.f32 %v18, %v19
  %v22 = vrot.slane %v10, 4
  %v24 = vadd.f32 %v21, %v22
  %v25 = vmul.f32 %v8, 1.57
  %v26 = vand.u32 2147483647, %v25
  %vm27 = vcmp.le.f32.partialorder %v26, 0.7853982
  %vm28 = vcmp.lt.s32.totalorder %v25, 0
  %v29 = vand.u32 %v25, 2139095040
  %v30 = vshrl.u32 %v29, 23
  %v31 = vsub.s32 %v30, 127
  %v32 = vand.u32 2147483647, %v25
  %v33 = vand.u32 %v32, 8388607
  %v34 = vor.u32 %v33, 8388608
  %v35 = vsub.s32 0, %v34
  %v36 = vadd.s32 %v31, 1
  %vm37 = vcmp.gt.s32.totalorder %v36, 0
  %v38 = vsel %vm37, %v36, 0
  %v39 = vshrl.u32 %v38, 5
  %v40 = vand.u32 %v38, 31
  %v41 = vsub.s32 32, %v40
  %v42 = vshrl.u32 683565275, %v41
  %v43 = vshll.u32 683565275, %v40
  %v44 = vshrl.u32 2475754826, %v41
  %v45 = vor.u32 %v43, %v44
  %v46 = vshll.u32 2475754826, %v40
  %v47 = vshrl.u32 2131351028, %v41
  %v48 = vor.u32 %v46, %v47
  %v49 = vshll.u32 2131351028, %v40
  %v50 = vshrl.u32 2102212464, %v41
  %v51 = vor.u32 %v49, %v50
  %v52 = vshll.u32 2102212464, %v40
  %v53 = vshrl.u32 920167782, %v41
  %v54 = vor.u32 %v52, %v53
  %v55 = vshll.u32 920167782, %v40
  %v56 = vshrl.u32 1326507024, %v41
  %v57 = vor.u32 %v55, %v56
  %vm58 = vcmp.lt.s32.totalorder %v39, 1
  %vm59 = vcmp.lt.s32.totalorder %v39, 2
  %vm60 = vcmp.lt.s32.totalorder %v39, 3
  %vm61 = vcmp.lt.s32.totalorder %v39, 4
  %v62 = vsel %vm58, %v42, %v45
  %v63 = vsel %vm61, %v51, 2102212464
  %v64 = vsel %vm60, %v48, %v63
  %v65 = vsel %vm59, %v62, %v64
  %v66 = vsel %vm58, %v45, %v48
  %v67 = vsel %vm61, %v54, 920167782
  %v68 = vsel %vm60, %v51, %v67
  %v69 = vsel %vm59, %v66, %v68
  %v70 = vsel %vm58, %v48, %v51
  %v71 = vsel %vm61, %v57, 1326507024
  %v72 = vsel %vm60, %v54, %v71
  %v73 = vsel %vm59, %v70, %v72
  %v74 = vshll.u32 %v34, 8
  %v75 = vmul.u32.u64.compose %v74, %v73
  %v76 = vextract.low.u32 %v75
  %v77 = vextract.high.u32 %v75
  %v78 = vmul.u32.u64.compose %v74, %v69
  %v79 = vextract.low.u32 %v78
  %v80 = vextract.high.u32 %v78
  %v81 = vmul.u32 %v74, %v65
  %v82 = vadd.s32 %v77, %v79
  %vm83 = vc.u32 %v77, %v79
  %v84 = vadd.s32 %v80, 1
  %v85 = vsel %vm83, %v84, %v80
  %v86 = vadd.s32 %v81, %v85
  %v87 = vadd.s32 %v86, 536870912
  %v88 = vshrl.u32 %v87, 30
  %v89 = vshll.u32 %v88, 30
  %v90 = vsub.s32 %v86, %v89
  %vm91 = vcmp.lt.s32.totalorder %v90, 0
  %v92 = vsub.s32 0, %v90
  %v93 = vsel %vm91, %v92, %v90
  %v94 = vclz %v93
  %v95 = vsub.s32 %v94, 2
  %vm96 = vcmp.gt.s32.totalorder 0, %v95
  %v97 = vsel %vm96, 0, %v95
  %v98 = vsub.s32 32, %v97
  %v99 = vshll.u32 %v90, %v97
  %v100 = vshrl.u32 %v82, %v98
  %v101 = vor.u32 %v99, %v100
  %v102 = vsub.s32 4294967266, %v97
  %v103 = vadd.s32 %v102, 127
  %v104 = vshll.u32 %v103, 23
  %v105 = vor.u32 4788187, %v104
  %v106 = vand.u32 2147483647, %v105
  %v108 = vcvt.s32.f32 %v101
  %v109 = vmul.f32 %v108, %v106
  %v110 = vxor.u32 %v109, 2147483648
  %v111 = vsel %vm28, %v110, %v109
  %v112 = vsub.s32 4, %v88
  %v113 = vsel %vm28, %v112, %v88
  %v114 = vsel %vm27, %v25, %v111
  %v115 = vsel %vm27, 0, %v113
  %v116 = vcosq.f32.pop %v114
  %v117 = vsinq.f32.pop %v114
  %vm118 = vweird.f32 %v25
  %v119 = vand.u32 %v115, 3
  %vm120 = vcmp.lt.s32.totalorder %v119, 2
  %vm121 = vcmp.eq.s32.totalorder %v119, 0
  %v122 = vxor.u32 %v117, 2147483648
  %v123 = vsel %vm121, %v116, %v122
  %vm124 = vcmp.eq.s32.totalorder %v119, 2
  %v125 = vxor.u32 %v116, 2147483648
  %v126 = vsel %vm124, %v125, %v117
  %v127 = vsel %vm120, %v123, %v126
  %v128 = vsel %vm118, nan, %v127
  %v129 = vand.u32 2147483647, %v25
  %vm130 = vcmp.le.f32.partialorder %v129, 0.7853982
  %vm131 = vcmp.lt.s32.totalorder %v25, 0
  %v132 = vand.u32 %v25, 2139095040
  %v133 = vshrl.u32 %v132, 23
  %v134 = vsub.s32 %v133, 127
  %v135 = vand.u32 2147483647, %v25
  %v136 = vand.u32 %v135, 8388607
  %v137 = vor.u32 %v136, 8388608
  %v138 = vsub.s32 0, %v137
  %v139 = vadd.s32 %v134, 1
  %vm140 = vcmp.gt.s32.totalorder %v139, 0
  %v141 = vsel %vm140, %v139, 0
  %v142 = vshrl.u32 %v141, 5
  %v143 = vand.u32 %v141, 31
  %v144 = vsub.s32 32, %v143
  %v145 = vshrl.u32 683565275, %v144
  %v146 = vshll.u32 683565275, %v143
  %v147 = vshrl.u32 2475754826, %v144
  %v148 = vor.u32 %v146, %v147
  %v149 = vshll.u32 2475754826, %v143
  %v150 = vshrl.u32 2131351028, %v144
  %v151 = vor.u32 %v149, %v150
  %v152 = vshll.u32 2131351028, %v143
  %v153 = vshrl.u32 2102212464, %v144
  %v154 = vor.u32 %v152, %v153
  %v155 = vshll.u32 2102212464, %v143
  %v156 = vshrl.u32 920167782, %v144
  %v157 = vor.u32 %v155, %v156
  %v158 = vshll.u32 920167782, %v143
  %v159 = vshrl.u32 1326507024, %v144
  %v160 = vor.u32 %v158, %v159
  %vm161 = vcmp.lt.s32.totalorder %v142, 1
  %vm162 = vcmp.lt.s32.totalorder %v142, 2
  %vm163 = vcmp.lt.s32.totalorder %v142, 3
  %vm164 = vcmp.lt.s32.totalorder %v142, 4
  %v165 = vsel %vm161, %v145, %v148
  %v166 = vsel %vm164, %v154, 2102212464
  %v167 = vsel %vm163, %v151, %v166
  %v168 = vsel %vm162, %v165, %v167
  %v169 = vsel %vm161, %v148, %v151
  %v170 = vsel %vm164, %v157, 920167782
  %v171 = vsel %vm163, %v154, %v170
  %v172 = vsel %vm162, %v169, %v171
  %v173 = vsel %vm161, %v151, %v154
  %v174 = vsel %vm164, %v160, 1326507024
  %v175 = vsel %vm163, %v157, %v174
  %v176 = vsel %vm162, %v173, %v175
  %v177 = vshll.u32 %v137, 8
  %v178 = vmul.u32.u64.compose %v177, %v176
  %v179 = vextract.low.u32 %v178
  %v180 = vextract.high.u32 %v178
  %v181 = vmul.u32.u64.compose %v177, %v172
  %v182 = vextract.low.u32 %v181
  %v183 = vextract.high.u32 %v181
  %v184 = vmul.u32 %v177, %v168
  %v185 = vadd.s32 %v180, %v182
  %vm186 = vc.u32 %v180, %v182
  %v187 = vadd.s32 %v183, 1
  %v188 = vsel %vm186, %v187, %v183
  %v189 = vadd.s32 %v184, %v188
  %v190 = vadd.s32 %v189, 536870912
  %v191 = vshrl.u32 %v190, 30
  %v192 = vshll.u32 %v191, 30
  %v193 = vsub.s32 %v189, %v192
  %vm194 = vcmp.lt.s32.totalorder %v193, 0
  %v195 = vsub.s32 0, %v193
  %v196 = vsel %vm194, %v195, %v193
  %v197 = vclz %v196
  %v198 = vsub.s32 %v197, 2
  %vm199 = vcmp.gt.s32.totalorder 0, %v198
  %v200 = vsel %vm199, 0, %v198
  %v201 = vsub.s32 32, %v200
  %v202 = vshll.u32 %v193, %v200
  %v203 = vshrl.u32 %v185, %v201
  %v204 = vor.u32 %v202, %v203
  %v205 = vsub.s32 4294967266, %v200
  %v206 = vadd.s32 %v205, 127
  %v207 = vshll.u32 %v206, 23
  %v208 = vor.u32 4788187, %v207
  %v209 = vand.u32 2147483647, %v208
  %v211 = vcvt.s32.f32 %v204
  %v212 = vmul.f32 %v211, %v209
  %v213 = vxor.u32 %v212, 2147483648
  %v214 = vsel %vm131, %v213, %v212
  %v215 = vsub.s32 4, %v191
  %v216 = vsel %vm131, %v215, %v191
  %v217 = vsel %vm130, %v25, %v214
  %v218 = vsel %vm130, 0, %v216
  %v219 = vcosq.f32.pop %v217
  %v220 = vsinq.f32.pop %v217
  %vm221 = vweird.f32 %v25
  %v222 = vadd.s32 %v218, 3
  %v223 = vand.u32 %v222, 3
  %vm224 = vcmp.lt.s32.totalorder %v223, 2
  %vm225 = vcmp.eq.s32.totalorder %v223, 0
  %v226 = vxor.u32 %v220, 2147483648
  %v227 = vsel %vm225, %v219, %v226
  %vm228 = vcmp.eq.s32.totalorder %v223, 2
  %v229 = vxor.u32 %v219, 2147483648
  %v230 = vsel %vm228, %v229, %v220
  %v231 = vsel %vm224, %v227, %v230
  %v232 = vsel %vm221, nan, %v231
  %v233 = vadd.f32 %v24, 1.0
  %v235 = vrot.slane %v232, 6
  %v237 = vmul.f32 %v233, %v235
  %v239 = vrot.slane %v128, 6
  %v241 = vmul.f32 %v233, %v239
  %v242 = vrot.slane %v232, 7
  %v244 = vmul.f32 %v241, %v242
  %v245 = vrot.slane %v128, 7
  %v247 = vmul.f32 %v241, %v245
  %v249 = vrot.slane %v247, 2
  %v252 = vrot.slane %v244, 1
  %vm254 = vcmask 1040384
  %v255 = vsel %vm254, %v249, %v252
  %vm256 = vcmask 1041408
  %v257 = vsel %vm256, %v255, %v237
  %258 = vst [vmem:[%s1] sm:$0x7] %v257
  // Predicated region
  $region6: #{_forward_single.1} parent=0 // pred_check
    _
  $region7: #{_forward_single.1} parent=0 // pred_check_branch
    %260 = sbr.rel (0) target = $region9
  $region8: #{_forward_single.1} parent=0 // pred_region
    _
  $region9: #{_forward_single.1} parent=0 // pred_fallthru
    _
  // Predicated region
  $region10: #{_forward_single.1} parent=0 // pred_check
    _
  $region11: #{_forward_single.1} parent=0 // pred_check_branch
    %262 = sbr.rel (0) target = $region13
  $region12: #{_forward_single.1} parent=0 // pred_region
    _
  $region13: #{_forward_single.1} parent=0 // pred_fallthru
    _

</llo_original>
